<compile_context>
chip_gen: v5e
topology: v5e:2x2
jax: 0.10.0
libtpu: 0.0.40
codegen_flags: <defaults>
</compile_context>

<pallas_src>
import functools

import jax
import jax.numpy as jnp
from jax.experimental import pallas as pl
from jax.experimental.pallas import tpu as pltpu

LANE = 128
SUBLANE = 8


def _round_up(n, m):
    return ((n + m - 1) // m) * m


def _pad2(a, rows, cols, dtype):
    """Zero-pad a 2-D array to (rows, cols) and cast to dtype."""
    return jnp.zeros((rows, cols), dtype).at[: a.shape[0], : a.shape[1]].set(
        a.astype(dtype)
    )


def _mlp_kernel(x_ref, w_ref, b_ref, o_ref):
    # x_ref: (tb, P) bf16   w_ref: (3, P, P) bf16   b_ref: (3, 1, P) f32
    # h1 = relu(x @ W1 + b1)   -- bf16 MXU operands, fp32 accumulation/epilogue
    h1 = jnp.dot(x_ref[...], w_ref[0], preferred_element_type=jnp.float32)
    h1 = jnp.maximum(h1 + b_ref[0], 0.0)
    # dropout1: identity (inference)
    # h2 = relu(h1 @ W2 + b2)
    h2 = jnp.dot(h1.astype(jnp.bfloat16), w_ref[1],
                 preferred_element_type=jnp.float32)
    h2 = jnp.maximum(h2 + b_ref[1], 0.0)
    # dropout2: identity (inference)
    # out = h2 @ W3 + b3
    out = jnp.dot(h2.astype(jnp.bfloat16), w_ref[2],
                  preferred_element_type=jnp.float32)
    o_ref[...] = (out + b_ref[2]).astype(o_ref.dtype)


def prepare_params(params):
    """One-time weight prep (call at init / after each optimizer step, NOT per forward).

    Pads every feature dim to a common lane-aligned size P, casts weights to
    bf16, and packs them into a single (3, P, P) array plus a (3, 1, P) fp32
    bias array.  Zero padding keeps the math exact: padded input/hidden cols
    hit zero weight rows, padded hidden cols are relu(0+0)=0, padded output
    cols are sliced off in the wrapper.
    """
    w1, b1, w2, b2, w3, b3 = params
    d_in, h1 = w1.shape
    h2, out_dim = w2.shape[1], w3.shape[1]
    # Common padded size so the three weights pack into one array.  For this
    # model every dim (16/32/32/4) pads to the same 128-lane minimum anyway.
    P = max(_round_up(d, LANE) for d in (d_in, h1, h2, out_dim))

    w_packed = jnp.stack([
        _pad2(w1, P, P, jnp.bfloat16),
        _pad2(w2, P, P, jnp.bfloat16),
        _pad2(w3, P, P, jnp.bfloat16),
    ])
    b_packed = jnp.stack([
        _pad2(jnp.reshape(b1, (1, -1)), 1, P, jnp.float32),
        _pad2(jnp.reshape(b2, (1, -1)), 1, P, jnp.float32),
        _pad2(jnp.reshape(b3, (1, -1)), 1, P, jnp.float32),
    ])
    return w_packed, b_packed, out_dim


@functools.partial(jax.jit, static_argnames=("out_dim", "batch_tile"))
def linear_qnet_forward(x, w_packed, b_packed, *, out_dim, batch_tile=512):
    """Linear_QNet forward.

    x: (B, D_in) fp32.  w_packed/b_packed: output of prepare_params().
    NOTE: if this is called in a hot loop on many tiny states, stack them into
    one (N*B, D_in) batch before calling — launch/DMA overhead dominates at B=8.
    """
    B, d_in = x.shape
    P = w_packed.shape[-1]

    # Batch tiling: multiple of 8 sublanes, capped at batch_tile, and capped so
    # mid/large batches produce >= 2 grid steps (lets v7x shard the "parallel"
    # axis across both TensorCores; a no-op cost on single-TC v5e/v6e).
    tb = min(batch_tile, _round_up(max(B // 2, SUBLANE), SUBLANE))
    b_p = _round_up(B, tb)
    n_tiles = b_p // tb

    # Activation padded + cast to bf16 here (only traffic that scales with B).
    xp = _pad2(x, b_p, P, jnp.bfloat16)

    # Cost estimate from *padded* shapes (actual DMA / MXU traffic).
    flops = 2 * b_p * 3 * P * P
    bytes_accessed = (
        b_p * P * 2          # x (bf16 in)
        + 3 * P * P * 2      # packed bf16 weights
        + 3 * P * 4          # packed fp32 biases
        + b_p * P * 4        # fp32 out
    )

    const3 = lambda i: (0, 0, 0)  # weights/biases resident across the batch grid
    out_padded = pl.pallas_call(
        _mlp_kernel,
        out_shape=jax.ShapeDtypeStruct((b_p, P), jnp.float32),
        grid=(n_tiles,),
        in_specs=[
            pl.BlockSpec((tb, P), lambda i: (i, 0)),
            pl.BlockSpec((3, P, P), const3),
            pl.BlockSpec((3, 1, P), const3),
        ],
        out_specs=pl.BlockSpec((tb, P), lambda i: (i, 0)),
        compiler_params=pltpu.CompilerParams(
            dimension_semantics=("parallel",)),
        cost_estimate=pl.CostEstimate(
            flops=flops, transcendentals=0, bytes_accessed=bytes_accessed),
    )(xp, w_packed, b_packed)

    return out_padded[:B, :out_dim]


def init_params(key, input_layer, hidden1, hidden2, output_layer,
                dtype=jnp.float32):
    """PyTorch-style uniform(+/- 1/sqrt(fan_in)) init.  Weights stored as (fan_in, fan_out)."""
    def linear_init(k, fan_in, fan_out):
        kw, kb = jax.random.split(k)
        bound = 1.0 / jnp.sqrt(fan_in)
        w = jax.random.uniform(kw, (fan_in, fan_out), dtype, -bound, bound)
        b = jax.random.uniform(kb, (1, fan_out), dtype, -bound, bound)
        return w, b

    k1, k2, k3 = jax.random.split(key, 3)
    w1, b1 = linear_init(k1, input_layer, hidden1)
    w2, b2 = linear_init(k2, hidden1, hidden2)
    w3, b3 = linear_init(k3, hidden2, output_layer)
    return (w1, b1, w2, b2, w3, b3)


def reference_forward(x, params):
    """Reference emulating the kernel's numerics (bf16 operands, fp32 accumulation)."""
    w1, b1, w2, b2, w3, b3 = params
    bf = jnp.bfloat16
    h1 = jnp.maximum(
        jnp.dot(x.astype(bf), w1.astype(bf), preferred_element_type=jnp.float32) + b1, 0.0)
    h2 = jnp.maximum(
        jnp.dot(h1.astype(bf), w2.astype(bf), preferred_element_type=jnp.float32) + b2, 0.0)
    return jnp.dot(h2.astype(bf), w3.astype(bf),
                   preferred_element_type=jnp.float32) + b3


if __name__ == "__main__":
    # Shapes consistent with Linear_QNet(input_layer, hidden1, hidden2, output_layer).
    batch, input_layer, hidden1, hidden2, output_layer = 8, 16, 32, 32, 4

    key = jax.random.PRNGKey(0)
    kx, kp = jax.random.split(key)
    x = jax.random.normal(kx, (batch, input_layer), dtype=jnp.float32)
    params = init_params(kp, input_layer, hidden1, hidden2, output_layer)

    # One-time weight prep (hoisted out of the hot forward path).
    w_packed, b_packed, out_dim = prepare_params(params)

    out = jax.block_until_ready(
        linear_qnet_forward(x, w_packed, b_packed, out_dim=out_dim))
    ref = reference_forward(x, params)

    assert out.shape == (batch, output_layer)
    assert jnp.allclose(out, ref, atol=5e-3, rtol=5e-3)

    # Also exercise a larger replay-batch path (multi-tile, parallel grid).
    xb = jax.random.normal(kx, (300, input_layer), dtype=jnp.float32)
    outb = jax.block_until_ready(
        linear_qnet_forward(xb, w_packed, b_packed, out_dim=out_dim))
    refb = reference_forward(xb, params)
    assert outb.shape == (300, output_layer)
    assert jnp.allclose(outb, refb, atol=5e-3, rtol=5e-3)

    # TODO(synk): bn1/bn2 exist in __init__ but are unused in forward(); dropout
    # is inference-mode identity (no stochastic masking implemented).
    print("KERNEL_OK")
</pallas_src>

<mosaic_0001>
module attributes {stable_mosaic.version = 11 : i64} {
  func.func @_mlp_kernel(%arg0: i32, %arg1: memref<8x128xbf16, #tpu.memory_space<vmem>>, %arg2: memref<3x128x128xbf16, #tpu.memory_space<vmem>>, %arg3: memref<3x1x128xf32, #tpu.memory_space<vmem>>, %arg4: memref<8x128xf32, #tpu.memory_space<vmem>>) attributes {dimension_semantics = [#tpu.dimension_semantics<parallel>], iteration_bounds = array<i64: 1>, scalar_prefetch = 0 : i64, scratch_operands = 0 : i64, tpu.core_type = #tpu.core_type<tc>, window_params = [{transform_indices = @transform_0, window_bounds = array<i64: 8, 128>}, {pipeline_mode = #tpu.pipeline_mode<synchronous>, transform_indices = @transform_1, window_bounds = array<i64: 3, 128, 128>}, {pipeline_mode = #tpu.pipeline_mode<synchronous>, transform_indices = @transform_2, window_bounds = array<i64: 3, 1, 128>}, {transform_indices = @transform_3, window_bounds = array<i64: 8, 128>}]} {
    %c0 = arith.constant 0 : index
    %c0_0 = arith.constant 0 : index
    %0 = vector.load %arg1[%c0, %c0_0] : memref<8x128xbf16, #tpu.memory_space<vmem>>, vector<8x128xbf16>
    %c0_1 = arith.constant 0 : index
    %c0_2 = arith.constant 0 : index
    %c0_3 = arith.constant 0 : index
    %1 = vector.load %arg2[%c0_1, %c0_2, %c0_3] : memref<3x128x128xbf16, #tpu.memory_space<vmem>>, vector<1x128x128xbf16>
    %2 = vector.shape_cast %1 : vector<1x128x128xbf16> to vector<128x128xbf16>
    %cst = arith.constant dense<0.000000e+00> : vector<8x128xf32>
    %3 = tpu.matmul %0, %2, %cst {dimension_numbers = #tpu.dot_dimension_numbers<[1], [0], [0], [1], [0, 0, 1, 1], [], []>} : vector<8x128xbf16>, vector<128x128xbf16>, vector<8x128xf32> -> vector<8x128xf32>
    %c0_4 = arith.constant 0 : index
    %c0_5 = arith.constant 0 : index
    %c0_6 = arith.constant 0 : index
    %4 = vector.load %arg3[%c0_4, %c0_5, %c0_6] : memref<3x1x128xf32, #tpu.memory_space<vmem>>, vector<1x1x128xf32>
    %5 = vector.shape_cast %4 : vector<1x1x128xf32> to vector<1x128xf32>
    %6 = vector.broadcast %5 : vector<1x128xf32> to vector<8x128xf32>
    %7 = arith.addf %3, %6 : vector<8x128xf32>
    %cst_7 = arith.constant 0.000000e+00 : f32
    %8 = vector.broadcast %cst_7 : f32 to vector<8x128xf32>
    %9 = arith.maximumf %7, %8 : vector<8x128xf32>
    %10 = arith.truncf %9 : vector<8x128xf32> to vector<8x128xbf16>
    %c1 = arith.constant 1 : index
    %c0_8 = arith.constant 0 : index
    %c0_9 = arith.constant 0 : index
    %11 = vector.load %arg2[%c1, %c0_8, %c0_9] : memref<3x128x128xbf16, #tpu.memory_space<vmem>>, vector<1x128x128xbf16>
    %12 = vector.shape_cast %11 : vector<1x128x128xbf16> to vector<128x128xbf16>
    %cst_10 = arith.constant dense<0.000000e+00> : vector<8x128xf32>
    %13 = tpu.matmul %10, %12, %cst_10 {dimension_numbers = #tpu.dot_dimension_numbers<[1], [0], [0], [1], [0, 0, 1, 1], [], []>} : vector<8x128xbf16>, vector<128x128xbf16>, vector<8x128xf32> -> vector<8x128xf32>
    %c1_11 = arith.constant 1 : index
    %c0_12 = arith.constant 0 : index
    %c0_13 = arith.constant 0 : index
    %14 = vector.load %arg3[%c1_11, %c0_12, %c0_13] : memref<3x1x128xf32, #tpu.memory_space<vmem>>, vector<1x1x128xf32>
    %15 = vector.shape_cast %14 : vector<1x1x128xf32> to vector<1x128xf32>
    %16 = vector.broadcast %15 : vector<1x128xf32> to vector<8x128xf32>
    %17 = arith.addf %13, %16 : vector<8x128xf32>
    %cst_14 = arith.constant 0.000000e+00 : f32
    %18 = vector.broadcast %cst_14 : f32 to vector<8x128xf32>
    %19 = arith.maximumf %17, %18 : vector<8x128xf32>
    %20 = arith.truncf %19 : vector<8x128xf32> to vector<8x128xbf16>
    %c2 = arith.constant 2 : index
    %c0_15 = arith.constant 0 : index
    %c0_16 = arith.constant 0 : index
    %21 = vector.load %arg2[%c2, %c0_15, %c0_16] : memref<3x128x128xbf16, #tpu.memory_space<vmem>>, vector<1x128x128xbf16>
    %22 = vector.shape_cast %21 : vector<1x128x128xbf16> to vector<128x128xbf16>
    %cst_17 = arith.constant dense<0.000000e+00> : vector<8x128xf32>
    %23 = tpu.matmul %20, %22, %cst_17 {dimension_numbers = #tpu.dot_dimension_numbers<[1], [0], [0], [1], [0, 0, 1, 1], [], []>} : vector<8x128xbf16>, vector<128x128xbf16>, vector<8x128xf32> -> vector<8x128xf32>
    %c2_18 = arith.constant 2 : index
    %c0_19 = arith.constant 0 : index
    %c0_20 = arith.constant 0 : index
    %24 = vector.load %arg3[%c2_18, %c0_19, %c0_20] : memref<3x1x128xf32, #tpu.memory_space<vmem>>, vector<1x1x128xf32>
    %25 = vector.shape_cast %24 : vector<1x1x128xf32> to vector<1x128xf32>
    %26 = vector.broadcast %25 : vector<1x128xf32> to vector<8x128xf32>
    %27 = arith.addf %23, %26 : vector<8x128xf32>
    %c0_21 = arith.constant 0 : index
    %c0_22 = arith.constant 0 : index
    %28 = vector.load %arg4[%c0_21, %c0_22] : memref<8x128xf32, #tpu.memory_space<vmem>>, vector<8x128xf32>
    tpu.vector_store %arg4[%c0_21, %c0_22], %27 {strides = array<i32>} : memref<8x128xf32, #tpu.memory_space<vmem>>, vector<8x128xf32>,
    return
  }
  func.func @transform_0(%arg0: i32) -> (i32, i32) {
    %c0_i32 = arith.constant 0 : i32
    %c0_i32_0 = arith.constant 0 : i32
    return %arg0, %c0_i32 : i32, i32
  }
  func.func @transform_1(%arg0: i32) -> (i32, i32, i32) {
    %c0_i32 = arith.constant 0 : i32
    %c0_i32_0 = arith.constant 0 : i32
    %c0_i32_1 = arith.constant 0 : i32
    %c0_i32_2 = arith.constant 0 : i32
    return %c0_i32, %c0_i32_0, %c0_i32_1 : i32, i32, i32
  }
  func.func @transform_2(%arg0: i32) -> (i32, i32, i32) {
    %c0_i32 = arith.constant 0 : i32
    %c0_i32_0 = arith.constant 0 : i32
    %c0_i32_1 = arith.constant 0 : i32
    %c0_i32_2 = arith.constant 0 : i32
    return %c0_i32, %c0_i32_0, %c0_i32_1 : i32, i32, i32
  }
  func.func @transform_3(%arg0: i32) -> (i32, i32) {
    %c0_i32 = arith.constant 0 : i32
    %c0_i32_0 = arith.constant 0 : i32
    return %arg0, %c0_i32 : i32, i32
  }
}

</mosaic_0001>

<llo_original>
// kernel: linear_qnet_forward.1
$region0: #{linear_qnet_forward.1}
  #allocation0 [shape = 'u32[]', space=smem, size = 0x4, offset = 0x4, fixed_abs, tag = 'smem constant byte address 0x4 - core index']
  #allocation1 [shape = 'u32[72,128]{1,0:T(1,128)}', space=vmem, size = 0x9000, scoped, tag = 'internal scratch']
  %s0 = inlined_call_operand.vmem [shape: bf16[8,128], index: 0, kind: input, shape index: {}]
  %s1 = inlined_call_operand.hbm [shape: bf16[3,128,128], index: 1, kind: input, shape index: {}]
  %s2 = inlined_call_operand.vmem [shape: f32[3,1,128], index: 2, kind: input, shape index: {}]
  %s3 = inlined_call_operand.vmem [shape: f32[8,128], index: 3, kind: output, shape index: {}]
  %s4 = sld [smem:[#allocation0]]
  $region26: #{linear_qnet_forward.1} parent=0
    _
  %s6 = ssub.s32 1, %s4
  %s7 = scalar_select 0, %s6, %s4
  $region1: #{linear_qnet_forward.1} parent=0
    #allocation2 [shape = 'u8[98304]{0}', space=vmem, size = 0x18000, scoped, tag = 'input window, operand 1, single buffered']
    #allocation3 [shape = 's32[1]{0}', space=sflag, size = 0x4, scoped, tag = 'scoped memory for linear_qnet_forward.1']
    %8 = vsyncpa [#allocation3], 0
    // Predicated region
    $region2: #{linear_qnet_forward.1} parent=1 // pred_check
      _
    $region3: #{linear_qnet_forward.1} parent=1 // pred_check_branch
      %10 = sbr.rel (0) target = $region5
    $region4: #{linear_qnet_forward.1} parent=1 // pred_region
      _
    $region5: #{linear_qnet_forward.1} parent=1 // pred_fallthru
      _
    // Predicated region
    $region6: #{linear_qnet_forward.1} parent=1 // pred_check
      _
    $region7: #{linear_qnet_forward.1} parent=1 // pred_check_branch
      %12 = sbr.rel (0) target = $region9
    $region8: #{linear_qnet_forward.1} parent=1 // pred_region
      %14 = vsyncadd [#allocation3], 0
      %s15 = sshll.u32 %s1, 4
      %s16 = int_to_ptr.hbm [resolvable:$true] %s15
      %s17 = sshll.u32 [#allocation2], 4
      %s18 = int_to_ptr.vmem [resolvable:$true] %s17
      %23 = dma.hbm_to_vmem [thread:$0]  %s16, 3072, %s18, [#allocation3], 64, 64, 4
    $region9: #{linear_qnet_forward.1} parent=1 // pred_fallthru
      _
    // Predicated region
    $region10: #{linear_qnet_forward.1} parent=1 // pred_check
      _
    $region11: #{linear_qnet_forward.1} parent=1 // pred_check_branch
      %25 = sbr.rel (0) target = $region13
    $region12: #{linear_qnet_forward.1} parent=1 // pred_region
      _
    $region13: #{linear_qnet_forward.1} parent=1 // pred_fallthru
      _
    // Predicated region
    $region14: #{linear_qnet_forward.1} parent=1 // pred_check
      _
    $region15: #{linear_qnet_forward.1} parent=1 // pred_check_branch
      %27 = sbr.rel (0) target = $region17
    $region16: #{linear_qnet_forward.1} parent=1 // pred_region
      %29 = dma.done [#allocation3], 3072
    $region17: #{linear_qnet_forward.1} parent=1 // pred_fallthru
      _
    %v30 = vld [vmem:[%s0] sm:$0xf]
    %v31 = vld [vmem:[#allocation2] sm:$0xf]
    %v32 = vld [vmem:[#allocation2 + $0x4] sm:$0xf]
    %v33 = vld [vmem:[#allocation2 + $0x8] sm:$0xf]
    %v34 = vld [vmem:[#allocation2 + $0xc] sm:$0xf]
    %v35 = vld [vmem:[#allocation2 + $0x10] sm:$0xf]
    %v36 = vld [vmem:[#allocation2 + $0x14] sm:$0xf]
    %v37 = vld [vmem:[#allocation2 + $0x18] sm:$0xf]
    %v38 = vld [vmem:[#allocation2 + $0x1c] sm:$0xf]
    %v39 = vld [vmem:[#allocation2 + $0x20] sm:$0xf]
    %v40 = vld [vmem:[#allocation2 + $0x24] sm:$0xf]
    %v41 = vld [vmem:[#allocation2 + $0x28] sm:$0xf]
    %v42 = vld [vmem:[#allocation2 + $0x2c] sm:$0xf]
    %v43 = vld [vmem:[#allocation2 + $0x30] sm:$0xf]
    %v44 = vld [vmem:[#allocation2 + $0x34] sm:$0xf]
    %v45 = vld [vmem:[#allocation2 + $0x38] sm:$0xf]
    %v46 = vld [vmem:[#allocation2 + $0x3c] sm:$0xf]
    %v47 = vld [vmem:[%s2] sm:$0x1]
    %v49 = vperm.slane %v47, 0
    %v67 = vunpack.c.l.b16 %v31
    %v68 = vunpack.c.l.b16 %v32
    %v69 = vunpack.c.l.b16 %v33
    %v70 = vunpack.c.l.b16 %v34
    %v71 = vunpack.c.l.b16 %v35
    %v72 = vunpack.c.l.b16 %v36
    %v73 = vunpack.c.l.b16 %v37
    %v74 = vunpack.c.l.b16 %v38
    %v75 = vunpack.c.l.b16 %v39
    %v76 = vunpack.c.l.b16 %v40
    %v77 = vunpack.c.l.b16 %v41
    %v78 = vunpack.c.l.b16 %v42
    %v79 = vunpack.c.l.b16 %v43
    %v80 = vunpack.c.l.b16 %v44
    %v81 = vunpack.c.l.b16 %v45
    %v82 = vunpack.c.l.b16 %v46
    %v83 = vpack.c.b16 %v68, %v67
    %v84 = vpack.c.b16 %v70, %v69
    %v85 = vpack.c.b16 %v72, %v71
    %v86 = vpack.c.b16 %v74, %v73
    %v87 = vpack.c.b16 %v76, %v75
    %v88 = vpack.c.b16 %v78, %v77
    %v89 = vpack.c.b16 %v80, %v79
    %v90 = vpack.c.b16 %v82, %v81
    %99 = vmatpush.bf16.msra.mxu0 %v90
    %100 = vmatpush.bf16.msra.mxu0 %v89
    %101 = vmatpush.bf16.msra.mxu0 %v88
    %102 = vmatpush.bf16.msra.mxu0 %v87
    %103 = vmatpush.bf16.msra.mxu0 %v86
    %104 = vmatpush.bf16.msra.mxu0 %v85
    %105 = vmatpush.bf16.msra.mxu0 %v84
    %106 = vmatpush.bf16.msra.mxu0 %v83
    %107 = vmatmul.bf16.gmra.mxu0 %v30
    %v108 = vpop.f32.mrf.mxu0
    %v109 = vadd.f32 %v49, %v108
    %v110 = vpop.f32.mrf.mxu0
    %111 = vdwg.mxu0
    %v112 = vmax.f32 %v109, 0.0
    %v113 = vpack.c.bf16 %v112, %v112
    %s114 = scalar_lea.vmem [#allocation2], 64
    %v115 = vld [vmem:[%s114] sm:$0xf]
    %v116 = vld [vmem:[%s114 + $0x4] sm:$0xf]
    %v117 = vld [vmem:[%s114 + $0x8] sm:$0xf]
    %v118 = vld [vmem:[%s114 + $0xc] sm:$0xf]
    %v119 = vld [vmem:[%s114 + $0x10] sm:$0xf]
    %v120 = vld [vmem:[%s114 + $0x14] sm:$0xf]
    %v121 = vld [vmem:[%s114 + $0x18] sm:$0xf]
    %v122 = vld [vmem:[%s114 + $0x1c] sm:$0xf]
    %v123 = vld [vmem:[%s114 + $0x20] sm:$0xf]
    %v124 = vld [vmem:[%s114 + $0x24] sm:$0xf]
    %v125 = vld [vmem:[%s114 + $0x28] sm:$0xf]
    %v126 = vld [vmem:[%s114 + $0x2c] sm:$0xf]
    %v127 = vld [vmem:[%s114 + $0x30] sm:$0xf]
    %v128 = vld [vmem:[%s114 + $0x34] sm:$0xf]
    %v129 = vld [vmem:[%s114 + $0x38] sm:$0xf]
    %v130 = vld [vmem:[%s114 + $0x3c] sm:$0xf]
    %s131 = scalar_lea.vmem %s2, 1
    %v132 = vld [vmem:[%s131] sm:$0x1]
    %v134 = vperm.slane %v132, 0
    %v152 = vunpack.c.l.b16 %v115
    %v153 = vunpack.c.l.b16 %v116
    %v154 = vunpack.c.l.b16 %v117
    %v155 = vunpack.c.l.b16 %v118
    %v156 = vunpack.c.l.b16 %v119
    %v157 = vunpack.c.l.b16 %v120
    %v158 = vunpack.c.l.b16 %v121
    %v159 = vunpack.c.l.b16 %v122
    %v160 = vunpack.c.l.b16 %v123
    %v161 = vunpack.c.l.b16 %v124
    %v162 = vunpack.c.l.b16 %v125
    %v163 = vunpack.c.l.b16 %v126
    %v164 = vunpack.c.l.b16 %v127
    %v165 = vunpack.c.l.b16 %v128
    %v166 = vunpack.c.l.b16 %v129
    %v167 = vunpack.c.l.b16 %v130
    %v168 = vpack.c.b16 %v153, %v152
    %v169 = vpack.c.b16 %v155, %v154
    %v170 = vpack.c.b16 %v157, %v156
    %v171 = vpack.c.b16 %v159, %v158
    %v172 = vpack.c.b16 %v161, %v160
    %v173 = vpack.c.b16 %v163, %v162
    %v174 = vpack.c.b16 %v165, %v164
    %v175 = vpack.c.b16 %v167, %v166
    %184 = vmatpush.bf16.msra.mxu0 %v175
    %185 = vmatpush.bf16.msra.mxu0 %v174
    %186 = vmatpush.bf16.msra.mxu0 %v173
    %187 = vmatpush.bf16.msra.mxu0 %v172
    %188 = vmatpush.bf16.msra.mxu0 %v171
    %189 = vmatpush.bf16.msra.mxu0 %v170
    %190 = vmatpush.bf16.msra.mxu0 %v169
    %191 = vmatpush.bf16.msra.mxu0 %v168
    %192 = vmatmul.bf16.gmra.mxu0 %v113
    %v193 = vpop.f32.mrf.mxu0
    %v194 = vadd.f32 %v134, %v193
    %v195 = vpop.f32.mrf.mxu0
    %196 = vdwg.mxu0
    %v197 = vmax.f32 %v194, 0.0
    %v198 = vpack.c.bf16 %v197, %v197
    %s199 = scalar_lea.vmem [#allocation2], 128
    %v200 = vld [vmem:[%s199] sm:$0xf]
    %v201 = vld [vmem:[%s199 + $0x4] sm:$0xf]
    %v202 = vld [vmem:[%s199 + $0x8] sm:$0xf]
    %v203 = vld [vmem:[%s199 + $0xc] sm:$0xf]
    %v204 = vld [vmem:[%s199 + $0x10] sm:$0xf]
    %v205 = vld [vmem:[%s199 + $0x14] sm:$0xf]
    %v206 = vld [vmem:[%s199 + $0x18] sm:$0xf]
    %v207 = vld [vmem:[%s199 + $0x1c] sm:$0xf]
    %v208 = vld [vmem:[%s199 + $0x20] sm:$0xf]
    %v209 = vld [vmem:[%s199 + $0x24] sm:$0xf]
    %v210 = vld [vmem:[%s199 + $0x28] sm:$0xf]
    %v211 = vld [vmem:[%s199 + $0x2c] sm:$0xf]
    %v212 = vld [vmem:[%s199 + $0x30] sm:$0xf]
    %v213 = vld [vmem:[%s199 + $0x34] sm:$0xf]
    %v214 = vld [vmem:[%s199 + $0x38] sm:$0xf]
    %v215 = vld [vmem:[%s199 + $0x3c] sm:$0xf]
    %s216 = scalar_lea.vmem %s2, 2
    %v217 = vld [vmem:[%s216] sm:$0x1]
    %v219 = vperm.slane %v217, 0
    %v237 = vunpack.c.l.b16 %v200
    %v238 = vunpack.c.l.b16 %v201
    %v239 = vunpack.c.l.b16 %v202
    %v240 = vunpack.c.l.b16 %v203
    %v241 = vunpack.c.l.b16 %v204
    %v242 = vunpack.c.l.b16 %v205
    %v243 = vunpack.c.l.b16 %v206
    %v244 = vunpack.c.l.b16 %v207
    %v245 = vunpack.c.l.b16 %v208
    %v246 = vunpack.c.l.b16 %v209
    %v247 = vunpack.c.l.b16 %v210
    %v248 = vunpack.c.l.b16 %v211
    %v249 = vunpack.c.l.b16 %v212
    %v250 = vunpack.c.l.b16 %v213
    %v251 = vunpack.c.l.b16 %v214
    %v252 = vunpack.c.l.b16 %v215
    %v253 = vpack.c.b16 %v238, %v237
    %v254 = vpack.c.b16 %v240, %v239
    %v255 = vpack.c.b16 %v242, %v241
    %v256 = vpack.c.b16 %v244, %v243
    %v257 = vpack.c.b16 %v246, %v245
    %v258 = vpack.c.b16 %v248, %v247
    %v259 = vpack.c.b16 %v250, %v249
    %v260 = vpack.c.b16 %v252, %v251
    %269 = vmatpush.bf16.msra.mxu0 %v260
    %270 = vmatpush.bf16.msra.mxu0 %v259
    %271 = vmatpush.bf16.msra.mxu0 %v258
    %272 = vmatpush.bf16.msra.mxu0 %v257
    %273 = vmatpush.bf16.msra.mxu0 %v256
    %274 = vmatpush.bf16.msra.mxu0 %v255
    %275 = vmatpush.bf16.msra.mxu0 %v254
    %276 = vmatpush.bf16.msra.mxu0 %v253
    %277 = vmatmul.bf16.gmra.mxu0 %v198
    %v278 = vpop.f32.mrf.mxu0
    %v279 = vadd.f32 %v219, %v278
    %v280 = vpop.f32.mrf.mxu0
    %281 = vdwg.mxu0
    %282 = vst [vmem:[%s3] sm:$0xff] %v279
    // Predicated region
    $region18: #{linear_qnet_forward.1} parent=1 // pred_check
      _
    $region19: #{linear_qnet_forward.1} parent=1 // pred_check_branch
      %284 = sbr.rel (0) target = $region21
    $region20: #{linear_qnet_forward.1} parent=1 // pred_region
      _
    $region21: #{linear_qnet_forward.1} parent=1 // pred_fallthru
      _
    // Predicated region
    $region22: #{linear_qnet_forward.1} parent=1 // pred_check
      _
    $region23: #{linear_qnet_forward.1} parent=1 // pred_check_branch
      %286 = sbr.rel (0) target = $region25
    $region24: #{linear_qnet_forward.1} parent=1 // pred_region
      _
    $region25: #{linear_qnet_forward.1} parent=1 // pred_fallthru
      _
    %287 = vsyncpa [#allocation3], 1

</llo_original>
